<compile_context>
chip_gen: v6e
topology: v6e:2x2x1
jax: 0.10.0
libtpu: 0.0.40
codegen_flags: <defaults>
</compile_context>

<pallas_src>
import functools

import numpy as np

import jax
import jax.numpy as jnp
from jax.experimental import pallas as pl
from jax.experimental.pallas import tpu as pltpu


def _fused_classifier_kernel(xf_ref, wc_ref, wh0_ref, pm_ref, o_ref, slab_ref,
                             *, offsets, n_out, n_ch):
    """conv3x3(SAME)+bias (one fused matmul) + ReLU + head row 0 + masked mean pool.

    xf_ref  : (C, NL)   bf16  padded input, spatial flattened per batch with a
                              fixed per-batch lane stride (lane-dense).
    wc_ref  : (F, K)    bf16  conv weight, K = 9*C + 2; col 36 = conv bias
                              (pairs with a ones row), col 37 = 0 (alignment pad).
    wh0_ref : (1, F)    f32   head weight row 0 (only logits[:, 0] is needed).
    pm_ref  : (B, N)    f32   lane-dense pooling operand: batch-select *
                              validity mask * 1/(H*W).
    o_ref   : (B, 1)    f32   first-class logit per batch (head bias added outside).
    slab_ref: (K, N)    bf16  VMEM scratch: stacked im2col slab.
    """
    xf = xf_ref[...]                                     # one VMEM read, reused 9x
    n_taps = len(offsets)
    # in-VMEM im2col: each conv tap is a static shifted lane-slice of the
    # flattened padded image, stored at an aligned sublane offset (C=4 even).
    for t, off in enumerate(offsets):
        slab_ref[t * n_ch:(t + 1) * n_ch, :] = xf[:, off:off + n_out]
    # two ones rows: row 36 carries the conv bias column, row 37 pairs with a
    # zero weight column so the bf16 sublane packing stays whole-sublane aligned.
    slab_ref[n_taps * n_ch:n_taps * n_ch + 2, :] = jnp.ones((2, n_out),
                                                            jnp.bfloat16)
    # fused conv + bias as a single (F, K) x (K, N) bf16 MXU matmul, f32 acc
    act = jnp.maximum(
        jnp.dot(wc_ref[...], slab_ref[...], preferred_element_type=jnp.float32),
        0.0)                                             # (F, N) f32
    # head row 0 applied before pooling (both are linear): lane-dense (1, N)
    r = jnp.dot(wh0_ref[...], act, preferred_element_type=jnp.float32)
    # pooling: batch-select * validity * 1/(H*W) folded into pm; broadcast
    # multiply + cross-lane reduce (XLU), no lane-sparse matmul.
    o_ref[...] = jnp.sum(pm_ref[...] * r, axis=-1, keepdims=True)


@jax.jit
def custom_model_drop_forward(x, params):
    """Forward pass equivalent to CustomModelDrop.forward: returns logits[:, 0].

    x: (B, C, H, W) float32, NCHW.
    """
    B, C, H, W = x.shape
    w_conv = params["w_conv"]          # (F, C, 3, 3)
    b_conv = params["b_conv"]          # (F,)
    w_head = params["w_head"]          # (NC, F)   (PyTorch Linear layout)
    b_head = params["b_head"]          # (NC,)
    F_ = w_conv.shape[0]

    Hp, Wp = H + 2, W + 2              # SAME padding for a 3x3 conv
    P = Hp * Wp                        # flat padded-image length per batch
    Lp = -(-P // 128) * 128            # per-batch lane stride (multiple of 128)
    max_off = 2 * Wp + 2               # largest conv tap offset
    T = -(-max_off // 128) * 128       # tail pad so shifted reads stay in bounds
    N = B * Lp                         # conv output lanes computed in-kernel
    NL = N + T
    n_taps = 9
    K = n_taps * C + 2                 # stacked taps + bias ones row + align pad

    # Input prep: one ~1x relayout (pad + flatten); the 9x expansion happens
    # only inside VMEM via the in-kernel shifted slices.
    xp = jnp.pad(x, ((0, 0), (0, 0), (1, 1), (1, 1)))           # (B, C, Hp, Wp)
    xf = xp.transpose(1, 0, 2, 3).reshape(C, B, P)
    xf = jnp.pad(xf, ((0, 0), (0, 0), (0, Lp - P))).reshape(C, N)
    xf = jnp.pad(xf, ((0, 0), (0, T))).astype(jnp.bfloat16)     # (C, NL)

    # Static conv tap offsets (host Python ints), ordered (dh, dw).
    offsets = tuple(dh * Wp + dw for dh in range(3) for dw in range(3))

    # Conv weight as ONE lane-dense (F, K) bf16 operand:
    #   cols [t*C + c] = w_conv[f, c, dh, dw], col 36 = conv bias, col 37 = 0.
    wflat = w_conv.transpose(0, 2, 3, 1).reshape(F_, n_taps * C)
    wc = jnp.concatenate(
        [wflat, b_conv[:, None], jnp.zeros((F_, 1), w_conv.dtype)],
        axis=1).astype(jnp.bfloat16)                            # (F, K)

    # Pooling operand precomputed with numpy at trace time (baked constant):
    # pm[b, n] = 1/(H*W) iff lane n belongs to batch b AND is a valid conv
    # output position; folds batch split + validity mask + mean factor.
    lane = np.arange(N)
    jmod = lane % Lp
    valid = (jmod < H * Wp) & ((jmod % Wp) < W)
    bsel = (lane // Lp)[None, :] == np.arange(B)[:, None]
    pm = jnp.asarray(np.where(bsel & valid[None, :],
                              1.0 / (H * W), 0.0).astype(np.float32))  # (B, N)

    # Head: only logits[:, 0] is returned -> keep a single f32 row.
    wh0 = w_head[0:1, :].astype(jnp.float32)                    # (1, F)

    kernel = functools.partial(_fused_classifier_kernel,
                               offsets=offsets, n_out=N, n_ch=C)
    out = pl.pallas_call(
        kernel,
        out_shape=jax.ShapeDtypeStruct((B, 1), jnp.float32),
        grid=(1,),
        in_specs=[
            pl.BlockSpec((C, NL), lambda i: (0, 0)),            # flattened input
            pl.BlockSpec((F_, K), lambda i: (0, 0)),            # fused conv weight
            pl.BlockSpec((1, F_), lambda i: (0, 0)),            # head row 0
            pl.BlockSpec((B, N), lambda i: (0, 0)),             # lane-dense pool mask
        ],
        out_specs=pl.BlockSpec((B, 1), lambda i: (0, 0)),
        scratch_shapes=[pltpu.VMEM((K, N), jnp.bfloat16)],      # im2col slab
        compiler_params=pltpu.CompilerParams(
            dimension_semantics=("arbitrary",)),
    )(xf, wc, wh0, pm)

    # `self.net(x)[:, 0]` -> first class logit per batch element (head bias
    # added outside the kernel: scalar, no VMEM tile / DMA descriptor).
    return out[:, 0] + b_head[0]


def init_params(key, in_chans=4, hidden=32, num_classes=10):
    k1, k2, k3, k4 = jax.random.split(key, 4)
    fan_in_conv = in_chans * 9
    fan_in_head = hidden
    return {
        "w_conv": jax.random.normal(k1, (hidden, in_chans, 3, 3),
                                    jnp.float32) / jnp.sqrt(fan_in_conv),
        "b_conv": jax.random.normal(k2, (hidden,), jnp.float32) * 0.01,
        "w_head": jax.random.normal(k3, (num_classes, hidden),
                                    jnp.float32) / jnp.sqrt(fan_in_head),
        "b_head": jax.random.normal(k4, (num_classes,), jnp.float32) * 0.01,
    }


if __name__ == "__main__":
    key = jax.random.PRNGKey(0)
    k_x, k_p = jax.random.split(key)

    # cfg.ch = 4 input channels, small spatial, cfg.num_classes = 10
    B, C, H, W = 2, 4, 16, 16
    x = jax.random.normal(k_x, (B, C, H, W), jnp.float32)

    params = init_params(k_p, in_chans=C, hidden=32, num_classes=10)

    out = custom_model_drop_forward(x, params)
    out = jax.block_until_ready(out)
    assert out.shape == (B,), out.shape

    # Pure-JAX reference check of the same synthetic net (f32 end-to-end).
    def ref(x, p):
        conv = jax.lax.conv_general_dilated(
            x, p["w_conv"], window_strides=(1, 1), padding="SAME",
            dimension_numbers=("NCHW", "OIHW", "NCHW"))
        conv = conv + p["b_conv"][None, :, None, None]
        act = jnp.maximum(conv, 0.0)
        pooled = act.mean(axis=(2, 3))                    # (B, F)
        logits = pooled @ p["w_head"].T + p["b_head"]     # (B, NC)
        return logits[:, 0]

    ref_out = ref(x, params)
    # Conv matmul operands (and the folded bias) are bf16 with f32
    # accumulation, so the tolerance is loosened vs the pure-f32 reference.
    assert jnp.allclose(out, ref_out, atol=5e-2, rtol=5e-2), (out, ref_out)

    print("KERNEL_OK")
</pallas_src>

<mosaic_0001>
module attributes {stable_mosaic.version = 11 : i64} {
  func.func @_fused_classifier_kernel(%arg0: i32, %arg1: memref<4x896xbf16, #tpu.memory_space<vmem>>, %arg2: memref<32x38xbf16, #tpu.memory_space<vmem>>, %arg3: memref<1x32xf32, #tpu.memory_space<vmem>>, %arg4: memref<2x768xf32, #tpu.memory_space<vmem>>, %arg5: memref<2x1xf32, #tpu.memory_space<vmem>>, %arg6: memref<38x768xbf16, #tpu.memory_space<vmem>>) attributes {dimension_semantics = [#tpu.dimension_semantics<arbitrary>], iteration_bounds = array<i64: 1>, scalar_prefetch = 0 : i64, scratch_operands = 1 : i64, tpu.core_type = #tpu.core_type<tc>, window_params = [{pipeline_mode = #tpu.pipeline_mode<synchronous>, transform_indices = @transform_0, window_bounds = array<i64: 4, 896>}, {pipeline_mode = #tpu.pipeline_mode<synchronous>, transform_indices = @transform_1, window_bounds = array<i64: 32, 38>}, {pipeline_mode = #tpu.pipeline_mode<synchronous>, transform_indices = @transform_2, window_bounds = array<i64: 1, 32>}, {pipeline_mode = #tpu.pipeline_mode<synchronous>, transform_indices = @transform_3, window_bounds = array<i64: 2, 768>}, {pipeline_mode = #tpu.pipeline_mode<synchronous>, transform_indices = @transform_4, window_bounds = array<i64: 2, 1>}]} {
    %c0 = arith.constant 0 : index
    %c0_0 = arith.constant 0 : index
    %0 = vector.load %arg1[%c0, %c0_0] : memref<4x896xbf16, #tpu.memory_space<vmem>>, vector<4x896xbf16>
    %1 = vector.extract_strided_slice %0 {offsets = [0, 0], sizes = [4, 768], strides = [1, 1]} : vector<4x896xbf16> to vector<4x768xbf16>
    %c0_1 = arith.constant 0 : index
    %c0_2 = arith.constant 0 : index
    %2 = vector.load %arg6[%c0_1, %c0_2] : memref<38x768xbf16, #tpu.memory_space<vmem>>, vector<4x768xbf16>
    tpu.vector_store %arg6[%c0_1, %c0_2], %1 {strides = array<i32>} : memref<38x768xbf16, #tpu.memory_space<vmem>>, vector<4x768xbf16>,
    %3 = vector.extract_strided_slice %0 {offsets = [0, 1], sizes = [4, 768], strides = [1, 1]} : vector<4x896xbf16> to vector<4x768xbf16>
    %c4 = arith.constant 4 : index
    %c0_3 = arith.constant 0 : index
    %4 = vector.load %arg6[%c4, %c0_3] : memref<38x768xbf16, #tpu.memory_space<vmem>>, vector<4x768xbf16>
    tpu.vector_store %arg6[%c4, %c0_3], %3 {strides = array<i32>} : memref<38x768xbf16, #tpu.memory_space<vmem>>, vector<4x768xbf16>,
    %5 = vector.extract_strided_slice %0 {offsets = [0, 2], sizes = [4, 768], strides = [1, 1]} : vector<4x896xbf16> to vector<4x768xbf16>
    %c8 = arith.constant 8 : index
    %c0_4 = arith.constant 0 : index
    %6 = vector.load %arg6[%c8, %c0_4] : memref<38x768xbf16, #tpu.memory_space<vmem>>, vector<4x768xbf16>
    tpu.vector_store %arg6[%c8, %c0_4], %5 {strides = array<i32>} : memref<38x768xbf16, #tpu.memory_space<vmem>>, vector<4x768xbf16>,
    %7 = vector.extract_strided_slice %0 {offsets = [0, 18], sizes = [4, 768], strides = [1, 1]} : vector<4x896xbf16> to vector<4x768xbf16>
    %c12 = arith.constant 12 : index
    %c0_5 = arith.constant 0 : index
    %8 = vector.load %arg6[%c12, %c0_5] : memref<38x768xbf16, #tpu.memory_space<vmem>>, vector<4x768xbf16>
    tpu.vector_store %arg6[%c12, %c0_5], %7 {strides = array<i32>} : memref<38x768xbf16, #tpu.memory_space<vmem>>, vector<4x768xbf16>,
    %9 = vector.extract_strided_slice %0 {offsets = [0, 19], sizes = [4, 768], strides = [1, 1]} : vector<4x896xbf16> to vector<4x768xbf16>
    %c16 = arith.constant 16 : index
    %c0_6 = arith.constant 0 : index
    %10 = vector.load %arg6[%c16, %c0_6] : memref<38x768xbf16, #tpu.memory_space<vmem>>, vector<4x768xbf16>
    tpu.vector_store %arg6[%c16, %c0_6], %9 {strides = array<i32>} : memref<38x768xbf16, #tpu.memory_space<vmem>>, vector<4x768xbf16>,
    %11 = vector.extract_strided_slice %0 {offsets = [0, 20], sizes = [4, 768], strides = [1, 1]} : vector<4x896xbf16> to vector<4x768xbf16>
    %c20 = arith.constant 20 : index
    %c0_7 = arith.constant 0 : index
    %12 = vector.load %arg6[%c20, %c0_7] : memref<38x768xbf16, #tpu.memory_space<vmem>>, vector<4x768xbf16>
    tpu.vector_store %arg6[%c20, %c0_7], %11 {strides = array<i32>} : memref<38x768xbf16, #tpu.memory_space<vmem>>, vector<4x768xbf16>,
    %13 = vector.extract_strided_slice %0 {offsets = [0, 36], sizes = [4, 768], strides = [1, 1]} : vector<4x896xbf16> to vector<4x768xbf16>
    %c24 = arith.constant 24 : index
    %c0_8 = arith.constant 0 : index
    %14 = vector.load %arg6[%c24, %c0_8] : memref<38x768xbf16, #tpu.memory_space<vmem>>, vector<4x768xbf16>
    tpu.vector_store %arg6[%c24, %c0_8], %13 {strides = array<i32>} : memref<38x768xbf16, #tpu.memory_space<vmem>>, vector<4x768xbf16>,
    %15 = vector.extract_strided_slice %0 {offsets = [0, 37], sizes = [4, 768], strides = [1, 1]} : vector<4x896xbf16> to vector<4x768xbf16>
    %c28 = arith.constant 28 : index
    %c0_9 = arith.constant 0 : index
    %16 = vector.load %arg6[%c28, %c0_9] : memref<38x768xbf16, #tpu.memory_space<vmem>>, vector<4x768xbf16>
    tpu.vector_store %arg6[%c28, %c0_9], %15 {strides = array<i32>} : memref<38x768xbf16, #tpu.memory_space<vmem>>, vector<4x768xbf16>,
    %17 = vector.extract_strided_slice %0 {offsets = [0, 38], sizes = [4, 768], strides = [1, 1]} : vector<4x896xbf16> to vector<4x768xbf16>
    %c32 = arith.constant 32 : index
    %c0_10 = arith.constant 0 : index
    %18 = vector.load %arg6[%c32, %c0_10] : memref<38x768xbf16, #tpu.memory_space<vmem>>, vector<4x768xbf16>
    tpu.vector_store %arg6[%c32, %c0_10], %17 {strides = array<i32>} : memref<38x768xbf16, #tpu.memory_space<vmem>>, vector<4x768xbf16>,
    %cst = arith.constant 1.000000e+00 : bf16
    %19 = vector.broadcast %cst : bf16 to vector<2x768xbf16>
    %c36 = arith.constant 36 : index
    %c0_11 = arith.constant 0 : index
    %20 = vector.load %arg6[%c36, %c0_11] : memref<38x768xbf16, #tpu.memory_space<vmem>>, vector<2x768xbf16>
    tpu.vector_store %arg6[%c36, %c0_11], %19 {strides = array<i32>} : memref<38x768xbf16, #tpu.memory_space<vmem>>, vector<2x768xbf16>,
    %c0_12 = arith.constant 0 : index
    %c0_13 = arith.constant 0 : index
    %21 = vector.load %arg2[%c0_12, %c0_13] : memref<32x38xbf16, #tpu.memory_space<vmem>>, vector<32x38xbf16>
    %c0_14 = arith.constant 0 : index
    %c0_15 = arith.constant 0 : index
    %22 = vector.load %arg6[%c0_14, %c0_15] : memref<38x768xbf16, #tpu.memory_space<vmem>>, vector<38x768xbf16>
    %cst_16 = arith.constant dense<0.000000e+00> : vector<32x768xf32>
    %23 = tpu.matmul %21, %22, %cst_16 {dimension_numbers = #tpu.dot_dimension_numbers<[1], [0], [0], [1], [0, 0, 1, 1], [], []>} : vector<32x38xbf16>, vector<38x768xbf16>, vector<32x768xf32> -> vector<32x768xf32>
    %cst_17 = arith.constant 0.000000e+00 : f32
    %24 = vector.broadcast %cst_17 : f32 to vector<32x768xf32>
    %25 = arith.maximumf %23, %24 : vector<32x768xf32>
    %c0_18 = arith.constant 0 : index
    %c0_19 = arith.constant 0 : index
    %26 = vector.load %arg3[%c0_18, %c0_19] : memref<1x32xf32, #tpu.memory_space<vmem>>, vector<1x32xf32>
    %cst_20 = arith.constant dense<0.000000e+00> : vector<1x768xf32>
    %27 = tpu.matmul %26, %25, %cst_20 {dimension_numbers = #tpu.dot_dimension_numbers<[1], [0], [0], [1], [0, 0, 1, 1], [], []>} : vector<1x32xf32>, vector<32x768xf32>, vector<1x768xf32> -> vector<1x768xf32>
    %c0_21 = arith.constant 0 : index
    %c0_22 = arith.constant 0 : index
    %28 = vector.load %arg4[%c0_21, %c0_22] : memref<2x768xf32, #tpu.memory_space<vmem>>, vector<2x768xf32>
    %29 = vector.broadcast %27 : vector<1x768xf32> to vector<2x768xf32>
    %30 = arith.mulf %28, %29 : vector<2x768xf32>
    %cst_23 = arith.constant dense<0.000000e+00> : vector<2xf32>
    %31 = vector.multi_reduction <add>, %30, %cst_23 [1] : vector<2x768xf32> to vector<2xf32>
    %32 = vector.shape_cast %31 : vector<2xf32> to vector<2x1xf32>
    %c0_24 = arith.constant 0 : index
    %c0_25 = arith.constant 0 : index
    %33 = vector.load %arg5[%c0_24, %c0_25] : memref<2x1xf32, #tpu.memory_space<vmem>>, vector<2x1xf32>
    tpu.vector_store %arg5[%c0_24, %c0_25], %32 {strides = array<i32>} : memref<2x1xf32, #tpu.memory_space<vmem>>, vector<2x1xf32>,
    return
  }
  func.func @transform_0(%arg0: i32) -> (i32, i32) {
    %c0_i32 = arith.constant 0 : i32
    %c0_i32_0 = arith.constant 0 : i32
    %c0_i32_1 = arith.constant 0 : i32
    return %c0_i32, %c0_i32_0 : i32, i32
  }
  func.func @transform_1(%arg0: i32) -> (i32, i32) {
    %c0_i32 = arith.constant 0 : i32
    %c0_i32_0 = arith.constant 0 : i32
    %c0_i32_1 = arith.constant 0 : i32
    return %c0_i32, %c0_i32_0 : i32, i32
  }
  func.func @transform_2(%arg0: i32) -> (i32, i32) {
    %c0_i32 = arith.constant 0 : i32
    %c0_i32_0 = arith.constant 0 : i32
    %c0_i32_1 = arith.constant 0 : i32
    return %c0_i32, %c0_i32_0 : i32, i32
  }
  func.func @transform_3(%arg0: i32) -> (i32, i32) {
    %c0_i32 = arith.constant 0 : i32
    %c0_i32_0 = arith.constant 0 : i32
    %c0_i32_1 = arith.constant 0 : i32
    return %c0_i32, %c0_i32_0 : i32, i32
  }
  func.func @transform_4(%arg0: i32) -> (i32, i32) {
    %c0_i32 = arith.constant 0 : i32
    %c0_i32_0 = arith.constant 0 : i32
    %c0_i32_1 = arith.constant 0 : i32
    return %c0_i32, %c0_i32_0 : i32, i32
  }
}

</mosaic_0001>

<llo_original>
// kernel: custom_model_drop_forward.1
$region0: #{custom_model_drop_forward.1}
  #allocation0 [shape = 'u32[]', space=smem, size = 0x4, offset = 0x4, fixed_abs, tag = 'smem constant byte address 0x4 - core index']
  #allocation1 [shape = 'u32[144,128]{1,0:T(1,128)}', space=vmem, size = 0x12000, scoped, tag = 'internal scratch']
  #allocation2 [shape = 'bf16[38,768]{1,0:T(8,128)(2,1)}', space=vmem, size = 0xf000, scoped, tag = 'scratch operand']
  %s0 = inlined_call_operand.vmem [shape: bf16[4,896], index: 0, kind: input, shape index: {}]
  %s1 = inlined_call_operand.vmem [shape: bf16[32,38], index: 1, kind: input, shape index: {}]
  %s2 = inlined_call_operand.vmem [shape: f32[1,32], index: 2, kind: input, shape index: {}]
  %s3 = inlined_call_operand.vmem [shape: f32[2,768], index: 3, kind: input, shape index: {}]
  %s4 = inlined_call_operand.vmem [shape: f32[2,1], index: 4, kind: output, shape index: {}]
  %s5 = sld [smem:[#allocation0]]
  $region26: #{custom_model_drop_forward.1} parent=0
    _
  %s7 = ssub.s32 1, %s5
  %s8 = scalar_select 0, %s7, %s5
  // Predicated region
  $region2: #{custom_model_drop_forward.1} parent=0 // pred_check
    _
  $region3: #{custom_model_drop_forward.1} parent=0 // pred_check_branch
    %10 = sbr.rel (0) target = $region5
  $region4: #{custom_model_drop_forward.1} parent=0 // pred_region
    _
  $region5: #{custom_model_drop_forward.1} parent=0 // pred_fallthru
    _
  // Predicated region
  $region6: #{custom_model_drop_forward.1} parent=0 // pred_check
    _
  $region7: #{custom_model_drop_forward.1} parent=0 // pred_check_branch
    %12 = sbr.rel (0) target = $region9
  $region8: #{custom_model_drop_forward.1} parent=0 // pred_region
    _
  $region9: #{custom_model_drop_forward.1} parent=0 // pred_fallthru
    _
  // Predicated region
  $region10: #{custom_model_drop_forward.1} parent=0 // pred_check
    _
  $region11: #{custom_model_drop_forward.1} parent=0 // pred_check_branch
    %14 = sbr.rel (0) target = $region13
  $region12: #{custom_model_drop_forward.1} parent=0 // pred_region
    _
  $region13: #{custom_model_drop_forward.1} parent=0 // pred_fallthru
    _
  // Predicated region
  $region14: #{custom_model_drop_forward.1} parent=0 // pred_check
    _
  $region15: #{custom_model_drop_forward.1} parent=0 // pred_check_branch
    %16 = sbr.rel (0) target = $region17
  $region16: #{custom_model_drop_forward.1} parent=0 // pred_region
    _
  $region17: #{custom_model_drop_forward.1} parent=0 // pred_fallthru
    _
  %v19 = vld [vmem:[%s0] sm:$0xff]
  %v20 = vld [vmem:[%s0 + $0x8] sm:$0x3f]
  %v23 = vcombine.high %v19, %v19
  %v25 = vunpack.c.l.s4 1983009808
  %v26 = vunpack.c.0.s8 %v25
  %v27 = vlaneseq
  %v28 = vshrl.u32 %v27, 7
  %v29 = vsub.s32 %v26, %v28
  %v30 = vrot.slane %v19, %v29
  %v32 = vunpack.c.l.s4 1983009808
  %v33 = vunpack.c.0.s8 %v32
  %v34 = vlaneseq
  %v35 = vshrl.u32 %v34, 7
  %v36 = vsub.s32 %v33, %v35
  %v37 = vrot.slane %v23, %v36
  %v39 = vunpack.c.l.s4 1983009808
  %v40 = vunpack.c.0.s8 %v39
  %v41 = vlaneseq
  %v42 = vshrl.u32 %v41, 7
  %v43 = vsub.s32 %v40, %v42
  %v44 = vrot.slane %v20, %v43
  %48 = vst [vmem:[#allocation2] sm:$0x33] %v30
  %49 = vst [vmem:[#allocation2 + $0x8] sm:$0x33] %v37
  %50 = vst [vmem:[#allocation2 + $0x10] sm:$0x33] %v44
  %v51 = vcombine.low %v19, %v19
  %v53 = vunpack.c.l.s4 1983009808
  %v54 = vunpack.c.0.s8 %v53
  %v55 = vlaneseq
  %v56 = vshrl.u32 %v55, 7
  %v57 = vsub.s32 %v54, %v56
  %v58 = vrot.slane %v51, %v57
  %v59 = vcombine.low %v20, %v20
  %v61 = vunpack.c.l.s4 1983009808
  %v62 = vunpack.c.0.s8 %v61
  %v63 = vlaneseq
  %v64 = vshrl.u32 %v63, 7
  %v65 = vsub.s32 %v62, %v64
  %v66 = vrot.slane %v59, %v65
  %67 = vrot.lane.b32.xlu0 %v58, 127
  %v68 = vpop.permute.xlu0 %67
  %69 = vrot.lane.b32.xlu0 %v30, 127
  %v70 = vpop.permute.xlu0 %69
  %71 = vrot.lane.b32.xlu0 %v66, 127
  %v72 = vpop.permute.xlu0 %71
  %73 = vrot.lane.b32.xlu0 %v44, 127
  %v74 = vpop.permute.xlu0 %73
  %v75 = vrot.slane %v68, 4
  %v76 = vrot.slane %v70, 4
  %v77 = vrot.slane %v72, 4
  %v78 = vrot.slane %v74, 4
  %vm79 = vcmask 1043456
  %v80 = vsel %vm79, %v75, %v76
  %vm81 = vcmask 1039360
  %v82 = vsel %vm81, %v68, %v80
  %v83 = vsel %vm79, %v76, %v77
  %v84 = vsel %vm81, %v70, %v83
  %v85 = vsel %vm79, %v77, %v78
  %v86 = vsel %vm81, %v72, %v85
  %90 = vst [vmem:[#allocation2] sm:$0xcc] %v82
  %91 = vst [vmem:[#allocation2 + $0x8] sm:$0xcc] %v84
  %92 = vst [vmem:[#allocation2 + $0x10] sm:$0xcc] %v86
  %v93 = vcombine.high %v20, %v20
  %v95 = vunpack.c.l.s4 1983009808
  %v96 = vunpack.c.0.s8 %v95
  %v97 = vlaneseq
  %v98 = vshrl.u32 %v97, 7
  %v99 = vsub.s32 %v96, %v98
  %v100 = vrot.slane %v93, %v99
  %101 = vrot.lane.b32.xlu0 %v30, 126
  %v102 = vpop.permute.xlu0 %101
  %103 = vrot.lane.b32.xlu0 %v37, 126
  %v104 = vpop.permute.xlu0 %103
  %105 = vrot.lane.b32.xlu0 %v44, 126
  %v106 = vpop.permute.xlu0 %105
  %107 = vrot.lane.b32.xlu0 %v100, 126
  %v108 = vpop.permute.xlu0 %107
  %v109 = vrot.slane %v102, 4
  %v110 = vrot.slane %v104, 4
  %v111 = vrot.slane %v106, 4
  %v112 = vrot.slane %v108, 4
  %v113 = vsel %vm79, %v109, %v110
  %vm114 = vcmask 1031168
  %v115 = vsel %vm114, %v102, %v113
  %v116 = vsel %vm79, %v110, %v111
  %v117 = vsel %vm114, %v104, %v116
  %v118 = vsel %vm79, %v111, %v112
  %v119 = vsel %vm114, %v106, %v118
  %123 = vst [vmem:[#allocation2 + $0x18] sm:$0x33] %v115
  %124 = vst [vmem:[#allocation2 + $0x20] sm:$0x33] %v117
  %125 = vst [vmem:[#allocation2 + $0x28] sm:$0x33] %v119
  %126 = vrot.lane.b32.xlu0 %v58, 110
  %v127 = vpop.permute.xlu0 %126
  %128 = vrot.lane.b32.xlu0 %v30, 110
  %v129 = vpop.permute.xlu0 %128
  %130 = vrot.lane.b32.xlu0 %v66, 110
  %v131 = vpop.permute.xlu0 %130
  %132 = vrot.lane.b32.xlu0 %v44, 110
  %v133 = vpop.permute.xlu0 %132
  %v134 = vrot.slane %v127, 4
  %v135 = vrot.slane %v129, 4
  %v136 = vrot.slane %v131, 4
  %v137 = vrot.slane %v133, 4
  %v138 = vsel %vm79, %v134, %v135
  %vm139 = vcmask 900096
  %v140 = vsel %vm139, %v127, %v138
  %v141 = vsel %vm79, %v135, %v136
  %v142 = vsel %vm139, %v129, %v141
  %v143 = vsel %vm79, %v136, %v137
  %v144 = vsel %vm139, %v131, %v143
  %148 = vst [vmem:[#allocation2 + $0x18] sm:$0xcc] %v140
  %149 = vst [vmem:[#allocation2 + $0x20] sm:$0xcc] %v142
  %150 = vst [vmem:[#allocation2 + $0x28] sm:$0xcc] %v144
  %151 = vrot.lane.b32.xlu0 %v30, 109
  %v152 = vpop.permute.xlu0 %151
  %153 = vrot.lane.b32.xlu0 %v37, 109
  %v154 = vpop.permute.xlu0 %153
  %155 = vrot.lane.b32.xlu0 %v44, 109
  %v156 = vpop.permute.xlu0 %155
  %157 = vrot.lane.b32.xlu0 %v100, 109
  %v158 = vpop.permute.xlu0 %157
  %v159 = vrot.slane %v152, 4
  %v160 = vrot.slane %v154, 4
  %v161 = vrot.slane %v156, 4
  %v162 = vrot.slane %v158, 4
  %v163 = vsel %vm79, %v159, %v160
  %vm164 = vcmask 891904
  %v165 = vsel %vm164, %v152, %v163
  %v166 = vsel %vm79, %v160, %v161
  %v167 = vsel %vm164, %v154, %v166
  %v168 = vsel %vm79, %v161, %v162
  %v169 = vsel %vm164, %v156, %v168
  %173 = vst [vmem:[#allocation2 + $0x30] sm:$0x33] %v165
  %174 = vst [vmem:[#allocation2 + $0x38] sm:$0x33] %v167
  %175 = vst [vmem:[#allocation2 + $0x40] sm:$0x33] %v169
  %176 = vrot.lane.b32.xlu0 %v58, 108
  %v177 = vpop.permute.xlu0 %176
  %178 = vrot.lane.b32.xlu0 %v30, 108
  %v179 = vpop.permute.xlu0 %178
  %180 = vrot.lane.b32.xlu0 %v66, 108
  %v181 = vpop.permute.xlu0 %180
  %182 = vrot.lane.b32.xlu0 %v44, 108
  %v183 = vpop.permute.xlu0 %182
  %v184 = vrot.slane %v177, 4
  %v185 = vrot.slane %v179, 4
  %v186 = vrot.slane %v181, 4
  %v187 = vrot.slane %v183, 4
  %v188 = vsel %vm79, %v184, %v185
  %vm189 = vcmask 883712
  %v190 = vsel %vm189, %v177, %v188
  %v191 = vsel %vm79, %v185, %v186
  %v192 = vsel %vm189, %v179, %v191
  %v193 = vsel %vm79, %v186, %v187
  %v194 = vsel %vm189, %v181, %v193
  %198 = vst [vmem:[#allocation2 + $0x30] sm:$0xcc] %v190
  %199 = vst [vmem:[#allocation2 + $0x38] sm:$0xcc] %v192
  %200 = vst [vmem:[#allocation2 + $0x40] sm:$0xcc] %v194
  %201 = vrot.lane.b32.xlu0 %v30, 92
  %v202 = vpop.permute.xlu0 %201
  %203 = vrot.lane.b32.xlu0 %v37, 92
  %v204 = vpop.permute.xlu0 %203
  %205 = vrot.lane.b32.xlu0 %v44, 92
  %v206 = vpop.permute.xlu0 %205
  %207 = vrot.lane.b32.xlu0 %v100, 92
  %v208 = vpop.permute.xlu0 %207
  %v209 = vrot.slane %v202, 4
  %v210 = vrot.slane %v204, 4
  %v211 = vrot.slane %v206, 4
  %v212 = vrot.slane %v208, 4
  %v213 = vsel %vm79, %v209, %v210
  %vm214 = vcmask 752640
  %v215 = vsel %vm214, %v202, %v213
  %v216 = vsel %vm79, %v210, %v211
  %v217 = vsel %vm214, %v204, %v216
  %v218 = vsel %vm79, %v211, %v212
  %v219 = vsel %vm214, %v206, %v218
  %223 = vst [vmem:[#allocation2 + $0x48] sm:$0x33] %v215
  %224 = vst [vmem:[#allocation2 + $0x50] sm:$0x33] %v217
  %225 = vst [vmem:[#allocation2 + $0x58] sm:$0x33] %v219
  %226 = vrot.lane.b32.xlu0 %v58, 91
  %v227 = vpop.permute.xlu0 %226
  %228 = vrot.lane.b32.xlu0 %v30, 91
  %v229 = vpop.permute.xlu0 %228
  %230 = vrot.lane.b32.xlu0 %v66, 91
  %v231 = vpop.permute.xlu0 %230
  %232 = vrot.lane.b32.xlu0 %v44, 91
  %v233 = vpop.permute.xlu0 %232
  %v234 = vrot.slane %v227, 4
  %v235 = vrot.slane %v229, 4
  %v236 = vrot.slane %v231, 4
  %v237 = vrot.slane %v233, 4
  %v238 = vsel %vm79, %v234, %v235
  %vm239 = vcmask 744448
  %v240 = vsel %vm239, %v227, %v238
  %v241 = vsel %vm79, %v235, %v236
  %v242 = vsel %vm239, %v229, %v241
  %v243 = vsel %vm79, %v236, %v237
  %v244 = vsel %vm239, %v231, %v243
  %248 = vst [vmem:[#allocation2 + $0x48] sm:$0xcc] %v240
  %249 = vst [vmem:[#allocation2 + $0x50] sm:$0xcc] %v242
  %250 = vst [vmem:[#allocation2 + $0x58] sm:$0xcc] %v244
  %251 = vrot.lane.b32.xlu0 %v30, 90
  %v252 = vpop.permute.xlu0 %251
  %253 = vrot.lane.b32.xlu0 %v37, 90
  %v254 = vpop.permute.xlu0 %253
  %255 = vrot.lane.b32.xlu0 %v44, 90
  %v256 = vpop.permute.xlu0 %255
  %257 = vrot.lane.b32.xlu0 %v100, 90
  %v258 = vpop.permute.xlu0 %257
  %v259 = vrot.slane %v252, 4
  %v260 = vrot.slane %v254, 4
  %v261 = vrot.slane %v256, 4
  %v262 = vrot.slane %v258, 4
  %v263 = vsel %vm79, %v259, %v260
  %vm264 = vcmask 736256
  %v265 = vsel %vm264, %v252, %v263
  %v266 = vsel %vm79, %v260, %v261
  %v267 = vsel %vm264, %v254, %v266
  %v268 = vsel %vm79, %v261, %v262
  %v269 = vsel %vm264, %v256, %v268
  %273 = vst [vmem:[#allocation2 + $0x60] sm:$0x33] %v265
  %274 = vst [vmem:[#allocation2 + $0x68] sm:$0x33] %v267
  %275 = vst [vmem:[#allocation2 + $0x70] sm:$0x33] %v269
  %276 = vst [vmem:[#allocation2 + $0x60] sm:$0x44] 1065369472
  %277 = vst [vmem:[#allocation2 + $0x68] sm:$0x44] 1065369472
  %278 = vst [vmem:[#allocation2 + $0x70] sm:$0x44] 1065369472
  %v279 = vld [vmem:[%s1] sm:$0xf]
  %v280 = vld [vmem:[%s1 + $0x4] sm:$0xf]
  %v281 = vld [vmem:[%s1 + $0x8] sm:$0xf]
  %v282 = vld [vmem:[%s1 + $0xc] sm:$0xf]
  %v283 = vld [vmem:[#allocation2] sm:$0xff]
  %v284 = vld [vmem:[#allocation2 + $0x8] sm:$0xff]
  %v285 = vld [vmem:[#allocation2 + $0x10] sm:$0xff]
  %v286 = vld [vmem:[#allocation2 + $0x18] sm:$0xff]
  %v287 = vld [vmem:[#allocation2 + $0x20] sm:$0xff]
  %v288 = vld [vmem:[#allocation2 + $0x28] sm:$0xff]
  %v289 = vld [vmem:[#allocation2 + $0x30] sm:$0xff]
  %v290 = vld [vmem:[#allocation2 + $0x38] sm:$0xff]
  %v291 = vld [vmem:[#allocation2 + $0x40] sm:$0xff]
  %v292 = vld [vmem:[#allocation2 + $0x48] sm:$0xff]
  %v293 = vld [vmem:[#allocation2 + $0x50] sm:$0xff]
  %v294 = vld [vmem:[#allocation2 + $0x58] sm:$0xff]
  %v295 = vld [vmem:[#allocation2 + $0x60] sm:$0x77]
  %v296 = vld [vmem:[#allocation2 + $0x68] sm:$0x77]
  %v297 = vld [vmem:[#allocation2 + $0x70] sm:$0x77]
  %v302 = vunpack.c.l.b16 %v279
  %v303 = vunpack.c.l.b16 %v280
  %v304 = vunpack.c.l.b16 %v281
  %v305 = vunpack.c.l.b16 %v282
  %v306 = vpack.c.b16 %v303, %v302
  %v307 = vpack.c.b16 %v305, %v304
  %v323 = vunpack.c.l.b16 %v283
  %v324 = vunpack.c.h.b16 %v283
  %v325 = vunpack.c.l.b16 %v284
  %v326 = vunpack.c.h.b16 %v284
  %v327 = vunpack.c.l.b16 %v285
  %v328 = vunpack.c.h.b16 %v285
  %v329 = vunpack.c.l.b16 %v286
  %v330 = vunpack.c.h.b16 %v286
  %v331 = vunpack.c.l.b16 %v287
  %v332 = vunpack.c.h.b16 %v287
  %v333 = vunpack.c.l.b16 %v288
  %v334 = vunpack.c.h.b16 %v288
  %v335 = vunpack.c.l.b16 %v289
  %v336 = vunpack.c.h.b16 %v289
  %v337 = vunpack.c.l.b16 %v290
  %v338 = vunpack.c.h.b16 %v290
  %v339 = vunpack.c.l.b16 %v291
  %v340 = vunpack.c.h.b16 %v291
  %v341 = vunpack.c.l.b16 %v292
  %v342 = vunpack.c.h.b16 %v292
  %v343 = vunpack.c.l.b16 %v293
  %v344 = vunpack.c.h.b16 %v293
  %v345 = vunpack.c.l.b16 %v294
  %v346 = vunpack.c.h.b16 %v294
  %v347 = vunpack.c.l.b16 %v295
  %v348 = vunpack.c.h.b16 %v295
  %v349 = vunpack.c.l.b16 %v296
  %v350 = vunpack.c.h.b16 %v296
  %v351 = vunpack.c.l.b16 %v297
  %v352 = vunpack.c.h.b16 %v297
  %v353 = vpack.c.b16 %v329, %v323
  %v354 = vpack.c.b16 %v330, %v324
  %v355 = vpack.c.b16 %v331, %v325
  %v356 = vpack.c.b16 %v332, %v326
  %v357 = vpack.c.b16 %v333, %v327
  %v358 = vpack.c.b16 %v334, %v328
  %v359 = vpack.c.b16 %v341, %v335
  %v360 = vpack.c.b16 %v342, %v336
  %v361 = vpack.c.b16 %v343, %v337
  %v362 = vpack.c.b16 %v344, %v338
  %v363 = vpack.c.b16 %v345, %v339
  %v364 = vpack.c.b16 %v346, %v340
  %v365 = vpack.c.b16 %v347, %v347
  %v366 = vpack.c.b16 %v348, %v348
  %v367 = vpack.c.b16 %v349, %v349
  %v368 = vpack.c.b16 %v350, %v350
  %v369 = vpack.c.b16 %v351, %v351
  %v370 = vpack.c.b16 %v352, %v352
  %vm383 = vcmask 310272
  %v385 = vsel %vm383, %v306, 0
  %v388 = vsel %vm383, %v307, 0
  %vm390 = vcmask 1042432
  %v392 = vsel %vm390, %v365, 0
  %v395 = vsel %vm390, %v366, 0
  %v398 = vsel %vm390, %v367, 0
  %v401 = vsel %vm390, %v368, 0
  %v404 = vsel %vm390, %v369, 0
  %v407 = vsel %vm390, %v370, 0
  %409 = vmatprep.subr.bf16.mxu0 0
  %410 = vmatpush1.bf16.msra.mxu0 0
  %411 = vmatprep.subr.bf16.mxu0 0
  %412 = vmatpush1.bf16.msra.mxu0 0
  %413 = vmatprep.subr.bf16.mxu0 0
  %414 = vmatpush1.bf16.msra.mxu0 0
  %415 = vmatprep.subr.bf16.mxu0 0
  %416 = vmatpush1.bf16.msra.mxu0 0
  %417 = vmatprep.subr.bf16.mxu0 0
  %418 = vmatpush1.bf16.msra.mxu0 0
  %419 = vmatprep.subr.bf16.mxu0 %v395
  %420 = vmatpush1.bf16.msra.mxu0 %v392
  %421 = vmatprep.subr.bf16.mxu0 %v360
  %422 = vmatpush1.bf16.msra.mxu0 %v359
  %423 = vmatprep.subr.bf16.mxu0 %v354
  %424 = vmatpush1.bf16.msra.mxu0 %v353
  %425 = vmatprep.subr.bf16.mxu0 0
  %426 = vmatpush2.bf16.msra.mxu0 0
  %427 = vmatprep.subr.bf16.mxu0 0
  %428 = vmatpush2.bf16.msra.mxu0 0
  %429 = vmatprep.subr.bf16.mxu0 0
  %430 = vmatpush2.bf16.msra.mxu0 0
  %431 = vmatprep.subr.bf16.mxu0 0
  %432 = vmatpush2.bf16.msra.mxu0 0
  %433 = vmatprep.subr.bf16.mxu0 0
  %434 = vmatpush2.bf16.msra.mxu0 0
  %435 = vmatprep.subr.bf16.mxu0 0
  %436 = vmatpush2.bf16.msra.mxu0 0
  %437 = vmatprep.subr.bf16.mxu0 0
  %438 = vmatpush2.bf16.msra.mxu0 0
  %439 = vmatprep.subr.bf16.mxu0 0
  %440 = vmatpush2.bf16.msra.mxu0 0
  %441 = vmatprep.mubr.bf16.mxu0 0
  %442 = vmatmul.mubr.bf16.gmra.mxu0 %v385
  %v443 = vpop.f32.mrf.mxu0
  %v444 = vadd.f32 0.0, %v443
  %v445 = vpop.f32.mrf.mxu0
  %v446 = vadd.f32 0.0, %v445
  %v447 = vpop.f32.mrf.mxu0
  %v448 = vadd.f32 0.0, %v447
  %v449 = vpop.f32.mrf.mxu0
  %v450 = vadd.f32 0.0, %v449
  %451 = vmatprep.mubr.bf16.mxu0 0
  %452 = vmatmul.mubr.bf16.gmra.mxu0 %v388
  %v453 = vpop.f32.mrf.mxu0
  %v454 = vadd.f32 0.0, %v453
  %v455 = vpop.f32.mrf.mxu0
  %v456 = vadd.f32 0.0, %v455
  %v457 = vpop.f32.mrf.mxu0
  %v458 = vadd.f32 0.0, %v457
  %v459 = vpop.f32.mrf.mxu0
  %v460 = vadd.f32 0.0, %v459
  %461 = vdwg.mxu0
  %462 = vmatprep.subr.bf16.mxu0 0
  %463 = vmatpush1.bf16.msra.mxu0 0
  %464 = vmatprep.subr.bf16.mxu0 0
  %465 = vmatpush1.bf16.msra.mxu0 0
  %466 = vmatprep.subr.bf16.mxu0 0
  %467 = vmatpush1.bf16.msra.mxu0 0
  %468 = vmatprep.subr.bf16.mxu0 0
  %469 = vmatpush1.bf16.msra.mxu0 0
  %470 = vmatprep.subr.bf16.mxu0 0
  %471 = vmatpush1.bf16.msra.mxu0 0
  %472 = vmatprep.subr.bf16.mxu0 %v401
  %473 = vmatpush1.bf16.msra.mxu0 %v398
  %474 = vmatprep.subr.bf16.mxu0 %v362
  %475 = vmatpush1.bf16.msra.mxu0 %v361
  %476 = vmatprep.subr.bf16.mxu0 %v356
  %477 = vmatpush1.bf16.msra.mxu0 %v355
  %478 = vmatprep.subr.bf16.mxu0 0
  %479 = vmatpush2.bf16.msra.mxu0 0
  %480 = vmatprep.subr.bf16.mxu0 0
  %481 = vmatpush2.bf16.msra.mxu0 0
  %482 = vmatprep.subr.bf16.mxu0 0
  %483 = vmatpush2.bf16.msra.mxu0 0
  %484 = vmatprep.subr.bf16.mxu0 0
  %485 = vmatpush2.bf16.msra.mxu0 0
  %486 = vmatprep.subr.bf16.mxu0 0
  %487 = vmatpush2.bf16.msra.mxu0 0
  %488 = vmatprep.subr.bf16.mxu0 0
  %489 = vmatpush2.bf16.msra.mxu0 0
  %490 = vmatprep.subr.bf16.mxu0 0
  %491 = vmatpush2.bf16.msra.mxu0 0
  %492 = vmatprep.subr.bf16.mxu0 0
  %493 = vmatpush2.bf16.msra.mxu0 0
  %494 = vmatprep.mubr.bf16.mxu0 0
  %495 = vmatmul.mubr.bf16.gmra.mxu0 %v385
  %v496 = vpop.f32.mrf.mxu0
  %v497 = vadd.f32 0.0, %v496
  %v498 = vpop.f32.mrf.mxu0
  %v499 = vadd.f32 0.0, %v498
  %v500 = vpop.f32.mrf.mxu0
  %v501 = vadd.f32 0.0, %v500
  %v502 = vpop.f32.mrf.mxu0
  %v503 = vadd.f32 0.0, %v502
  %504 = vmatprep.mubr.bf16.mxu0 0
  %505 = vmatmul.mubr.bf16.gmra.mxu0 %v388
  %v506 = vpop.f32.mrf.mxu0
  %v507 = vadd.f32 0.0, %v506
  %v508 = vpop.f32.mrf.mxu0
  %v509 = vadd.f32 0.0, %v508
  %v510 = vpop.f32.mrf.mxu0
  %v511 = vadd.f32 0.0, %v510
  %v512 = vpop.f32.mrf.mxu0
  %v513 = vadd.f32 0.0, %v512
  %514 = vdwg.mxu0
  %515 = vmatprep.subr.bf16.mxu0 0
  %516 = vmatpush1.bf16.msra.mxu0 0
  %517 = vmatprep.subr.bf16.mxu0 0
  %518 = vmatpush1.bf16.msra.mxu0 0
  %519 = vmatprep.subr.bf16.mxu0 0
  %520 = vmatpush1.bf16.msra.mxu0 0
  %521 = vmatprep.subr.bf16.mxu0 0
  %522 = vmatpush1.bf16.msra.mxu0 0
  %523 = vmatprep.subr.bf16.mxu0 0
  %524 = vmatpush1.bf16.msra.mxu0 0
  %525 = vmatprep.subr.bf16.mxu0 %v407
  %526 = vmatpush1.bf16.msra.mxu0 %v404
  %527 = vmatprep.subr.bf16.mxu0 %v364
  %528 = vmatpush1.bf16.msra.mxu0 %v363
  %529 = vmatprep.subr.bf16.mxu0 %v358
  %530 = vmatpush1.bf16.msra.mxu0 %v357
  %531 = vmatprep.subr.bf16.mxu0 0
  %532 = vmatpush2.bf16.msra.mxu0 0
  %533 = vmatprep.subr.bf16.mxu0 0
  %534 = vmatpush2.bf16.msra.mxu0 0
  %535 = vmatprep.subr.bf16.mxu0 0
  %536 = vmatpush2.bf16.msra.mxu0 0
  %537 = vmatprep.subr.bf16.mxu0 0
  %538 = vmatpush2.bf16.msra.mxu0 0
  %539 = vmatprep.subr.bf16.mxu0 0
  %540 = vmatpush2.bf16.msra.mxu0 0
  %541 = vmatprep.subr.bf16.mxu0 0
  %542 = vmatpush2.bf16.msra.mxu0 0
  %543 = vmatprep.subr.bf16.mxu0 0
  %544 = vmatpush2.bf16.msra.mxu0 0
  %545 = vmatprep.subr.bf16.mxu0 0
  %546 = vmatpush2.bf16.msra.mxu0 0
  %547 = vmatprep.mubr.bf16.mxu0 0
  %548 = vmatmul.mubr.bf16.gmra.mxu0 %v385
  %v549 = vpop.f32.mrf.mxu0
  %v550 = vadd.f32 0.0, %v549
  %v551 = vpop.f32.mrf.mxu0
  %v552 = vadd.f32 0.0, %v551
  %v553 = vpop.f32.mrf.mxu0
  %v554 = vadd.f32 0.0, %v553
  %v555 = vpop.f32.mrf.mxu0
  %v556 = vadd.f32 0.0, %v555
  %557 = vmatprep.mubr.bf16.mxu0 0
  %558 = vmatmul.mubr.bf16.gmra.mxu0 %v388
  %v559 = vpop.f32.mrf.mxu0
  %v560 = vadd.f32 0.0, %v559
  %v561 = vpop.f32.mrf.mxu0
  %v562 = vadd.f32 0.0, %v561
  %v563 = vpop.f32.mrf.mxu0
  %v564 = vadd.f32 0.0, %v563
  %v565 = vpop.f32.mrf.mxu0
  %v566 = vadd.f32 0.0, %v565
  %567 = vdwg.mxu0
  %v568 = vmax.f32 %v444, 0.0
  %v569 = vmax.f32 %v446, 0.0
  %v570 = vmax.f32 %v497, 0.0
  %v571 = vmax.f32 %v499, 0.0
  %v572 = vmax.f32 %v550, 0.0
  %v573 = vmax.f32 %v552, 0.0
  %v574 = vmax.f32 %v448, 0.0
  %v575 = vmax.f32 %v450, 0.0
  %v576 = vmax.f32 %v501, 0.0
  %v577 = vmax.f32 %v503, 0.0
  %v578 = vmax.f32 %v554, 0.0
  %v579 = vmax.f32 %v556, 0.0
  %v580 = vmax.f32 %v454, 0.0
  %v581 = vmax.f32 %v456, 0.0
  %v582 = vmax.f32 %v507, 0.0
  %v583 = vmax.f32 %v509, 0.0
  %v584 = vmax.f32 %v560, 0.0
  %v585 = vmax.f32 %v562, 0.0
  %v586 = vmax.f32 %v458, 0.0
  %v587 = vmax.f32 %v460, 0.0
  %v588 = vmax.f32 %v511, 0.0
  %v589 = vmax.f32 %v513, 0.0
  %v590 = vmax.f32 %v564, 0.0
  %v591 = vmax.f32 %v566, 0.0
  %v592 = vld [vmem:[%s2] sm:$0x1]
  %vm593 = vcmask 261120
  %v595 = vsel %vm593, %v592, 0
  %597 = vmatprep.subr.mxu0 0.0
  %598 = vmatpush1.msra.mxu0 0.0
  %599 = vmatprep.subr.mxu0 0.0
  %600 = vmatpush1.msra.mxu0 0.0
  %601 = vmatprep.subr.mxu0 0.0
  %602 = vmatpush1.msra.mxu0 0.0
  %603 = vmatprep.subr.mxu0 0.0
  %604 = vmatpush1.msra.mxu0 0.0
  %605 = vmatprep.subr.mxu0 0.0
  %606 = vmatpush1.msra.mxu0 0.0
  %607 = vmatprep.subr.mxu0 0.0
  %608 = vmatpush1.msra.mxu0 0.0
  %609 = vmatprep.subr.mxu0 0.0
  %610 = vmatpush1.msra.mxu0 0.0
  %611 = vmatprep.subr.mxu0 0.0
  %612 = vmatpush1.msra.mxu0 0.0
  %613 = vmatprep.subr.mxu0 0.0
  %614 = vmatpush1.msra.mxu0 0.0
  %615 = vmatprep.subr.mxu0 0.0
  %616 = vmatpush1.msra.mxu0 0.0
  %617 = vmatprep.subr.mxu0 0.0
  %618 = vmatpush1.msra.mxu0 0.0
  %619 = vmatprep.subr.mxu0 0.0
  %620 = vmatpush1.msra.mxu0 0.0
  %621 = vmatprep.subr.mxu0 %v587
  %622 = vmatpush1.msra.mxu0 %v586
  %623 = vmatprep.subr.mxu0 %v581
  %624 = vmatpush1.msra.mxu0 %v580
  %625 = vmatprep.subr.mxu0 %v575
  %626 = vmatpush1.msra.mxu0 %v574
  %627 = vmatprep.subr.mxu0 %v569
  %628 = vmatpush1.msra.mxu0 %v568
  %629 = vmatprep.subr.mxu0 0.0
  %630 = vmatpush2.msra.mxu0 0.0
  %631 = vmatprep.subr.mxu0 0.0
  %632 = vmatpush2.msra.mxu0 0.0
  %633 = vmatprep.subr.mxu0 0.0
  %634 = vmatpush2.msra.mxu0 0.0
  %635 = vmatprep.subr.mxu0 0.0
  %636 = vmatpush2.msra.mxu0 0.0
  %637 = vmatprep.subr.mxu0 0.0
  %638 = vmatpush2.msra.mxu0 0.0
  %639 = vmatprep.subr.mxu0 0.0
  %640 = vmatpush2.msra.mxu0 0.0
  %641 = vmatprep.subr.mxu0 0.0
  %642 = vmatpush2.msra.mxu0 0.0
  %643 = vmatprep.subr.mxu0 0.0
  %644 = vmatpush2.msra.mxu0 0.0
  %645 = vmatprep.subr.mxu0 0.0
  %646 = vmatpush2.msra.mxu0 0.0
  %647 = vmatprep.subr.mxu0 0.0
  %648 = vmatpush2.msra.mxu0 0.0
  %649 = vmatprep.subr.mxu0 0.0
  %650 = vmatpush2.msra.mxu0 0.0
  %651 = vmatprep.subr.mxu0 0.0
  %652 = vmatpush2.msra.mxu0 0.0
  %653 = vmatprep.subr.mxu0 0.0
  %654 = vmatpush2.msra.mxu0 0.0
  %655 = vmatprep.subr.mxu0 0.0
  %656 = vmatpush2.msra.mxu0 0.0
  %657 = vmatprep.subr.mxu0 0.0
  %658 = vmatpush2.msra.mxu0 0.0
  %659 = vmatprep.subr.mxu0 0.0
  %660 = vmatpush2.msra.mxu0 0.0
  %661 = vmatprep.mubr.f32.mxu0 0.0
  %662 = vmatmul.mubr.f32.gmra.mxu0 %v595
  %v663 = vpop.f32.mrf.mxu0
  %v664 = vadd.f32 0.0, %v663
  %v665 = vpop.f32.mrf.mxu0
  %v666 = vadd.f32 0.0, %v665
  %667 = vdwg.mxu0
  %668 = vmatprep.subr.mxu0 0.0
  %669 = vmatpush1.msra.mxu0 0.0
  %670 = vmatprep.subr.mxu0 0.0
  %671 = vmatpush1.msra.mxu0 0.0
  %672 = vmatprep.subr.mxu0 0.0
  %673 = vmatpush1.msra.mxu0 0.0
  %674 = vmatprep.subr.mxu0 0.0
  %675 = vmatpush1.msra.mxu0 0.0
  %676 = vmatprep.subr.mxu0 0.0
  %677 = vmatpush1.msra.mxu0 0.0
  %678 = vmatprep.subr.mxu0 0.0
  %679 = vmatpush1.msra.mxu0 0.0
  %680 = vmatprep.subr.mxu0 0.0
  %681 = vmatpush1.msra.mxu0 0.0
  %682 = vmatprep.subr.mxu0 0.0
  %683 = vmatpush1.msra.mxu0 0.0
  %684 = vmatprep.subr.mxu0 0.0
  %685 = vmatpush1.msra.mxu0 0.0
  %686 = vmatprep.subr.mxu0 0.0
  %687 = vmatpush1.msra.mxu0 0.0
  %688 = vmatprep.subr.mxu0 0.0
  %689 = vmatpush1.msra.mxu0 0.0
  %690 = vmatprep.subr.mxu0 0.0
  %691 = vmatpush1.msra.mxu0 0.0
  %692 = vmatprep.subr.mxu0 %v589
  %693 = vmatpush1.msra.mxu0 %v588
  %694 = vmatprep.subr.mxu0 %v583
  %695 = vmatpush1.msra.mxu0 %v582
  %696 = vmatprep.subr.mxu0 %v577
  %697 = vmatpush1.msra.mxu0 %v576
  %698 = vmatprep.subr.mxu0 %v571
  %699 = vmatpush1.msra.mxu0 %v570
  %700 = vmatprep.subr.mxu0 0.0
  %701 = vmatpush2.msra.mxu0 0.0
  %702 = vmatprep.subr.mxu0 0.0
  %703 = vmatpush2.msra.mxu0 0.0
  %704 = vmatprep.subr.mxu0 0.0
  %705 = vmatpush2.msra.mxu0 0.0
  %706 = vmatprep.subr.mxu0 0.0
  %707 = vmatpush2.msra.mxu0 0.0
  %708 = vmatprep.subr.mxu0 0.0
  %709 = vmatpush2.msra.mxu0 0.0
  %710 = vmatprep.subr.mxu0 0.0
  %711 = vmatpush2.msra.mxu0 0.0
  %712 = vmatprep.subr.mxu0 0.0
  %713 = vmatpush2.msra.mxu0 0.0
  %714 = vmatprep.subr.mxu0 0.0
  %715 = vmatpush2.msra.mxu0 0.0
  %716 = vmatprep.subr.mxu0 0.0
  %717 = vmatpush2.msra.mxu0 0.0
  %718 = vmatprep.subr.mxu0 0.0
  %719 = vmatpush2.msra.mxu0 0.0
  %720 = vmatprep.subr.mxu0 0.0
  %721 = vmatpush2.msra.mxu0 0.0
  %722 = vmatprep.subr.mxu0 0.0
  %723 = vmatpush2.msra.mxu0 0.0
  %724 = vmatprep.subr.mxu0 0.0
  %725 = vmatpush2.msra.mxu0 0.0
  %726 = vmatprep.subr.mxu0 0.0
  %727 = vmatpush2.msra.mxu0 0.0
  %728 = vmatprep.subr.mxu0 0.0
  %729 = vmatpush2.msra.mxu0 0.0
  %730 = vmatprep.subr.mxu0 0.0
  %731 = vmatpush2.msra.mxu0 0.0
  %732 = vmatprep.mubr.f32.mxu0 0.0
  %733 = vmatmul.mubr.f32.gmra.mxu0 %v595
  %v734 = vpop.f32.mrf.mxu0
  %v735 = vadd.f32 0.0, %v734
  %v736 = vpop.f32.mrf.mxu0
  %v737 = vadd.f32 0.0, %v736
  %738 = vdwg.mxu0
  %739 = vmatprep.subr.mxu0 0.0
  %740 = vmatpush1.msra.mxu0 0.0
  %741 = vmatprep.subr.mxu0 0.0
  %742 = vmatpush1.msra.mxu0 0.0
  %743 = vmatprep.subr.mxu0 0.0
  %744 = vmatpush1.msra.mxu0 0.0
  %745 = vmatprep.subr.mxu0 0.0
  %746 = vmatpush1.msra.mxu0 0.0
  %747 = vmatprep.subr.mxu0 0.0
  %748 = vmatpush1.msra.mxu0 0.0
  %749 = vmatprep.subr.mxu0 0.0
  %750 = vmatpush1.msra.mxu0 0.0
  %751 = vmatprep.subr.mxu0 0.0
  %752 = vmatpush1.msra.mxu0 0.0
  %753 = vmatprep.subr.mxu0 0.0
  %754 = vmatpush1.msra.mxu0 0.0
  %755 = vmatprep.subr.mxu0 0.0
  %756 = vmatpush1.msra.mxu0 0.0
  %757 = vmatprep.subr.mxu0 0.0
  %758 = vmatpush1.msra.mxu0 0.0
  %759 = vmatprep.subr.mxu0 0.0
  %760 = vmatpush1.msra.mxu0 0.0
  %761 = vmatprep.subr.mxu0 0.0
  %762 = vmatpush1.msra.mxu0 0.0
  %763 = vmatprep.subr.mxu0 %v591
  %764 = vmatpush1.msra.mxu0 %v590
  %765 = vmatprep.subr.mxu0 %v585
  %766 = vmatpush1.msra.mxu0 %v584
  %767 = vmatprep.subr.mxu0 %v579
  %768 = vmatpush1.msra.mxu0 %v578
  %769 = vmatprep.subr.mxu0 %v573
  %770 = vmatpush1.msra.mxu0 %v572
  %771 = vmatprep.subr.mxu0 0.0
  %772 = vmatpush2.msra.mxu0 0.0
  %773 = vmatprep.subr.mxu0 0.0
  %774 = vmatpush2.msra.mxu0 0.0
  %775 = vmatprep.subr.mxu0 0.0
  %776 = vmatpush2.msra.mxu0 0.0
  %777 = vmatprep.subr.mxu0 0.0
  %778 = vmatpush2.msra.mxu0 0.0
  %779 = vmatprep.subr.mxu0 0.0
  %780 = vmatpush2.msra.mxu0 0.0
  %781 = vmatprep.subr.mxu0 0.0
  %782 = vmatpush2.msra.mxu0 0.0
  %783 = vmatprep.subr.mxu0 0.0
  %784 = vmatpush2.msra.mxu0 0.0
  %785 = vmatprep.subr.mxu0 0.0
  %786 = vmatpush2.msra.mxu0 0.0
  %787 = vmatprep.subr.mxu0 0.0
  %788 = vmatpush2.msra.mxu0 0.0
  %789 = vmatprep.subr.mxu0 0.0
  %790 = vmatpush2.msra.mxu0 0.0
  %791 = vmatprep.subr.mxu0 0.0
  %792 = vmatpush2.msra.mxu0 0.0
  %793 = vmatprep.subr.mxu0 0.0
  %794 = vmatpush2.msra.mxu0 0.0
  %795 = vmatprep.subr.mxu0 0.0
  %796 = vmatpush2.msra.mxu0 0.0
  %797 = vmatprep.subr.mxu0 0.0
  %798 = vmatpush2.msra.mxu0 0.0
  %799 = vmatprep.subr.mxu0 0.0
  %800 = vmatpush2.msra.mxu0 0.0
  %801 = vmatprep.subr.mxu0 0.0
  %802 = vmatpush2.msra.mxu0 0.0
  %803 = vmatprep.mubr.f32.mxu0 0.0
  %804 = vmatmul.mubr.f32.gmra.mxu0 %v595
  %v805 = vpop.f32.mrf.mxu0
  %v806 = vadd.f32 0.0, %v805
  %v807 = vpop.f32.mrf.mxu0
  %v808 = vadd.f32 0.0, %v807
  %809 = vdwg.mxu0
  %v810 = vld [vmem:[%s3] sm:$0xff]
  %v811 = vld [vmem:[%s3 + $0x8] sm:$0xf]
  %v812 = vlaneseq
  %v813 = vshrl.u32 %v812, 7
  %v814 = vsub.s32 0, %v813
  %v815 = vrot.slane %v664, %v814
  %v816 = vlaneseq
  %v817 = vshrl.u32 %v816, 7
  %v818 = vsub.s32 0, %v817
  %v819 = vrot.slane %v666, %v818
  %v820 = vlaneseq
  %v821 = vshrl.u32 %v820, 7
  %v822 = vsub.s32 0, %v821
  %v823 = vrot.slane %v735, %v822
  %v824 = vlaneseq
  %v825 = vshrl.u32 %v824, 7
  %v826 = vsub.s32 0, %v825
  %v827 = vrot.slane %v737, %v826
  %v828 = vlaneseq
  %v829 = vshrl.u32 %v828, 7
  %v830 = vsub.s32 0, %v829
  %v831 = vrot.slane %v806, %v830
  %v832 = vlaneseq
  %v833 = vshrl.u32 %v832, 7
  %v834 = vsub.s32 0, %v833
  %v835 = vrot.slane %v808, %v834
  %v842 = vcombine.low %v815, %v819
  %v843 = vcombine.low %v823, %v827
  %v845 = vunpack.c.l.s4 1983009808
  %v846 = vunpack.c.0.s8 %v845
  %v847 = vlaneseq
  %v848 = vshrl.u32 %v847, 7
  %v849 = vsub.s32 %v846, %v848
  %v850 = vrot.slane %v842, %v849
  %v852 = vunpack.c.l.s4 1983009808
  %v853 = vunpack.c.0.s8 %v852
  %v854 = vlaneseq
  %v855 = vshrl.u32 %v854, 7
  %v856 = vsub.s32 %v853, %v855
  %v857 = vrot.slane %v843, %v856
  %v858 = vcombine.low %v850, %v857
  %v859 = vcombine.low %v831, %v835
  %v861 = vunpack.c.l.s4 1983009808
  %v862 = vunpack.c.0.s8 %v861
  %v863 = vlaneseq
  %v864 = vshrl.u32 %v863, 7
  %v865 = vsub.s32 %v862, %v864
  %v866 = vrot.slane %v859, %v865
  %v869 = vmul.f32 %v810, %v858
  %v870 = vmul.f32 %v811, %v866
  %v873 = vcombine.high %v869, %v869
  %v875 = vunpack.c.l.s4 1983009808
  %v876 = vunpack.c.0.s8 %v875
  %v877 = vlaneseq
  %v878 = vshrl.u32 %v877, 7
  %v879 = vsub.s32 %v876, %v878
  %v880 = vrot.slane %v869, %v879
  %v882 = vunpack.c.l.s4 1983009808
  %v883 = vunpack.c.0.s8 %v882
  %v884 = vlaneseq
  %v885 = vshrl.u32 %v884, 7
  %v886 = vsub.s32 %v883, %v885
  %v887 = vrot.slane %v873, %v886
  %v888 = vcombine.high %v880, %v880
  %v889 = vcombine.high %v887, %v887
  %v891 = vunpack.c.l.s4 1983009808
  %v892 = vunpack.c.0.s8 %v891
  %v893 = vlaneseq
  %v894 = vshrl.u32 %v893, 7
  %v895 = vsub.s32 %v892, %v894
  %v896 = vrot.slane %v870, %v895
  %v897 = vcombine.high %v896, %v896
  %vm904 = vcmask 1041408
  %v905 = vsel %vm904, %v880, 0.0
  %v906 = vsel %vm904, %v888, 0.0
  %v907 = vadd.f32 %v905, %v906
  %v908 = vsel %vm904, %v887, 0.0
  %v909 = vadd.f32 %v907, %v908
  %v910 = vsel %vm904, %v889, 0.0
  %v911 = vadd.f32 %v909, %v910
  %v912 = vsel %vm904, %v896, 0.0
  %v913 = vadd.f32 %v911, %v912
  %v914 = vsel %vm904, %v897, 0.0
  %v915 = vadd.f32 %v913, %v914
  %916 = vadd.xlane.f32.xlu0 %v915
  %v917 = vpop.xlane.xlu0 %916
  %vm918 = vcmask 1024
  %919 = vst.msk [vmem:[%s4] sm:$0x3] %vm918, %v917
  // Predicated region
  $region18: #{custom_model_drop_forward.1} parent=0 // pred_check
    _
  $region19: #{custom_model_drop_forward.1} parent=0 // pred_check_branch
    %921 = sbr.rel (0) target = $region21
  $region20: #{custom_model_drop_forward.1} parent=0 // pred_region
    _
  $region21: #{custom_model_drop_forward.1} parent=0 // pred_fallthru
    _
  // Predicated region
  $region22: #{custom_model_drop_forward.1} parent=0 // pred_check
    _
  $region23: #{custom_model_drop_forward.1} parent=0 // pred_check_branch
    %923 = sbr.rel (0) target = $region25
  $region24: #{custom_model_drop_forward.1} parent=0 // pred_region
    _
  $region25: #{custom_model_drop_forward.1} parent=0 // pred_fallthru
    _

</llo_original>
